<compile_context>
chip_gen: v7x
topology: tpu7x:2x2x1
jax: 0.10.0
libtpu: 0.0.40
codegen_flags: <defaults>
</compile_context>

<pallas_src>
import functools

import jax
import jax.numpy as jnp
import numpy as np
from jax.experimental import pallas as pl
from jax.experimental.pallas import tpu as pltpu

MASK_VALUE = -1e9  # additive bias for non-edges -> exactly 0 after softmax (f32)


# --------------------------- tiled projection matmul ------------------------ #

def _matmul_kernel(x_ref, w_ref, o_ref, acc_ref):
    @pl.when(pl.program_id(2) == 0)
    def _():
        acc_ref[...] = jnp.zeros_like(acc_ref)

    acc_ref[...] += jnp.dot(x_ref[...], w_ref[...],
                            preferred_element_type=jnp.float32)

    @pl.when(pl.program_id(2) == pl.num_programs(2) - 1)
    def _():
        o_ref[...] = acc_ref[...].astype(o_ref.dtype)


def _pick_tile(dim, candidates):
    for c in candidates:
        if dim % c == 0:
            return c
    return dim  # full extent is always a legal block


def pallas_matmul(x, w):
    """(M, K) @ (K, N) -> (M, N) f32.  bf16 MXU operands, f32 accumulation."""
    M, K = x.shape
    K2, N = w.shape
    assert K == K2
    tm = _pick_tile(M, (128, 256))
    tn = _pick_tile(N, (128, 256))
    tk = _pick_tile(K, (512, 256, 128))
    grid = (M // tm, N // tn, K // tk)
    return pl.pallas_call(
        _matmul_kernel,
        out_shape=jax.ShapeDtypeStruct((M, N), jnp.float32),
        grid_spec=pltpu.PrefetchScalarGridSpec(
            num_scalar_prefetch=0,
            grid=grid,
            in_specs=[
                pl.BlockSpec((tm, tk), lambda i, j, k: (i, k)),
                pl.BlockSpec((tk, tn), lambda i, j, k: (k, j)),
            ],
            out_specs=pl.BlockSpec((tm, tn), lambda i, j, k: (i, j)),
            scratch_shapes=[pltpu.VMEM((tm, tn), jnp.float32)],
        ),
        compiler_params=pltpu.CompilerParams(
            dimension_semantics=("parallel", "parallel", "arbitrary")),
    )(x.astype(jnp.bfloat16), w.astype(jnp.bfloat16))


# ------------------------------ attention kernel ---------------------------- #

def _gat_attn_kernel(tab_ref, fsrc_ref, el_ref, er_ref, code_ref, out_ref, *rest,
                     num_heads, out_feats, num_etypes, slope, emit_attn):
    """One dst-row tile, all heads.

    tab_ref : SMEM (T, H) f32    per-(etype, head) attention bias
    fsrc    : (Nsrc, H*F) bf16   projected node features (resident)
    el      : (H, Nsrc)  f32     src-side attention term (resident)
    er      : (TILE_D, H) f32    dst-side attention term (this tile)
    code    : (TILE_D, Nsrc) i32 edge-type codes (sentinel T for non-edges)
    out     : (TILE_D, H*F) f32  aggregated messages (lane-dense)
    a_ref   : (H, TILE_D, Nsrc)  optional dense attention output
    """
    a_ref = rest[0] if emit_attn else None
    H, F, T = num_heads, out_feats, num_etypes

    code = code_ref[...]
    fsrc = fsrc_ref[...]
    el = el_ref[...]
    er = er_ref[...]

    # etype one-hot masks hoisted across heads: T compares instead of H*T.
    eqs = [code == t for t in range(T)]

    head_outs = []
    for h in range(H):
        # per-edge additive bias: table[etype] on real edges, MASK on non-edges
        # (sentinel code T never matches -> stays at MASK_VALUE).
        ee = jnp.full(code.shape, MASK_VALUE, jnp.float32)
        for t in range(T):
            ee = jnp.where(eqs[t], tab_ref[t, h], ee)

        # u_add_v('el', 'er') + ee, then leaky_relu (softmax math stays in f32)
        logits = el[h:h + 1, :] + er[:, h:h + 1] + ee
        logits = jnp.maximum(logits, slope * logits)

        # edge_softmax per dst row; non-edges are exp(-huge) == 0 exactly
        m = jnp.max(logits, axis=-1, keepdims=True)
        p = jnp.exp(logits - m)
        denom = jnp.sum(p, axis=-1, keepdims=True)
        inv = pl.reciprocal(denom, approx=True)

        fsrc_h = fsrc[:, h * F:(h + 1) * F]
        if emit_attn:
            a = p * inv
            a_ref[h] = a
            head_outs.append(
                jnp.dot(a.astype(jnp.bfloat16), fsrc_h,
                        preferred_element_type=jnp.float32))
        else:
            # fast path: normalise AFTER the matmul (TILE_D*F muls, not TILE_D*N)
            acc = jnp.dot(p.astype(jnp.bfloat16), fsrc_h,
                          preferred_element_type=jnp.float32)
            head_outs.append(acc * inv)

    # single lane-dense (TILE_D, H*F) store
    out_ref[...] = jnp.concatenate(head_outs, axis=-1)


def _attn_vmem_bytes(N, H, F, T, tile_d, emit_attn):
    hf = H * F
    resident = N * hf * 2 + H * N * 4              # fsrc (bf16) + el (f32)
    tiled = tile_d * H * 4 + tile_d * N * 4 + tile_d * hf * 4
    if emit_attn:
        tiled += H * tile_d * N * 4
    scratch = 4 * tile_d * N * 4 + T * tile_d * N  # softmax temps + etype masks
    return resident + 2 * tiled + scratch          # tiled operands double-buffered


def _choose_dst_tile(N, H, F, T, emit_attn, budget=12 * 2**20):
    cands = [c for c in (512, 256, 128, 64, 32, 16, 8) if c <= N and N % c == 0]
    if not cands:
        return N
    for c in cands:  # prefer >=2 tiles so the parallel axis feeds both v7x cores
        if N // c >= 2 and _attn_vmem_bytes(N, H, F, T, c, emit_attn) <= budget:
            return c
    return cands[-1]


def gat_attention(fsrc_flat, el_t, er, code, ee_table, *, num_heads, out_feats,
                  negative_slope=0.2, return_attention=False):
    N, HF = fsrc_flat.shape
    H, F = num_heads, out_feats
    T = ee_table.shape[0]
    tile_d = _choose_dst_tile(N, H, F, T, return_attention)
    grid = (N // tile_d,)

    kernel = functools.partial(
        _gat_attn_kernel, num_heads=H, out_feats=F, num_etypes=T,
        slope=negative_slope, emit_attn=return_attention)

    out_shapes = [jax.ShapeDtypeStruct((N, HF), jnp.float32)]
    out_specs = [pl.BlockSpec((tile_d, HF), lambda i: (i, 0))]
    if return_attention:
        out_shapes.append(jax.ShapeDtypeStruct((H, N, N), jnp.float32))
        out_specs.append(pl.BlockSpec((H, tile_d, N), lambda i: (0, i, 0)))

    vmem_limit = int(min(max(2 * _attn_vmem_bytes(N, H, F, T, tile_d,
                                                  return_attention),
                             32 * 2**20), 48 * 2**20))

    outs = pl.pallas_call(
        kernel,
        out_shape=tuple(out_shapes),
        grid_spec=pltpu.PrefetchScalarGridSpec(
            num_scalar_prefetch=0,
            grid=grid,
            in_specs=[
                pl.BlockSpec(memory_space=pltpu.MemorySpace.SMEM),  # (T, H) bias table
                pl.BlockSpec((N, HF), lambda i: (0, 0)),            # feat_src, resident
                pl.BlockSpec((H, N), lambda i: (0, 0)),             # el, resident
                pl.BlockSpec((tile_d, H), lambda i: (i, 0)),        # er, per dst tile
                pl.BlockSpec((tile_d, N), lambda i: (i, 0)),        # edge codes, per dst tile
            ],
            out_specs=tuple(out_specs),
        ),
        compiler_params=pltpu.CompilerParams(
            dimension_semantics=("parallel",),
            vmem_limit_bytes=vmem_limit),
    )(ee_table, fsrc_flat, el_t, er, code)

    if return_attention:
        return outs[0], outs[1]
    return outs[0]


# ---------------------------- parameters & forward -------------------------- #

def init_params(key, in_feats, out_feats, num_heads, edge_feats, num_etypes):
    gain = np.sqrt(2.0)  # nn.init.calculate_gain('relu')

    def xavier_normal(k, shape, fan_in, fan_out):
        std = gain * np.sqrt(2.0 / (fan_in + fan_out))
        return (std * jax.random.normal(k, shape)).astype(jnp.float32)

    k = jax.random.split(key, 6)
    HF = num_heads * out_feats
    HE = num_heads * edge_feats
    return {
        # fc.weight / fc_e.weight stored pre-transposed (in, out): no .T copy needed
        "W_fc_t": xavier_normal(k[0], (in_feats, HF), in_feats, HF),
        "W_e_t": xavier_normal(k[1], (edge_feats, HE), edge_feats, HE),
        "attn_l": xavier_normal(k[2], (1, num_heads, out_feats), out_feats, num_heads),
        "attn_r": xavier_normal(k[3], (1, num_heads, out_feats), out_feats, num_heads),
        "attn_e": xavier_normal(k[4], (1, num_heads, edge_feats), edge_feats, num_heads),
        "edge_emb": jax.random.normal(k[5], (num_etypes, edge_feats), dtype=jnp.float32),
    }


def my_gat_conv_forward(params, feat, etype_mat, adj, *, num_heads, out_feats,
                        edge_feats, negative_slope=0.2, return_attention=False):
    N, Din = feat.shape
    H, F, EF = num_heads, out_feats, edge_feats
    HF = H * F
    T = params["edge_emb"].shape[0]

    # fused projection: one MXU pass produces [feat_src | el | er]
    W_fc_t = params["W_fc_t"]                                   # (Din, H*F)
    w3 = W_fc_t.reshape(Din, H, F)
    w_el = jnp.einsum("khf,hf->kh", w3, params["attn_l"][0])    # (Din, H)
    w_er = jnp.einsum("khf,hf->kh", w3, params["attn_r"][0])    # (Din, H)
    W_aug = jnp.concatenate([W_fc_t, w_el, w_er], axis=1)       # (Din, H*F + 2H)

    proj = pallas_matmul(feat, W_aug)                           # (N, H*F + 2H) f32
    fsrc_flat = proj[:, :HF].astype(jnp.bfloat16)               # MXU operand dtype
    el_t = proj[:, HF:HF + H].T                                 # (H, N) f32, src side
    er = proj[:, HF + H:HF + 2 * H]                             # (N, H) f32, dst side

    # tiny per-edge-type bias table (plain XLA)
    e_proj = (params["edge_emb"] @ params["W_e_t"]).reshape(T, H, EF)
    ee_table = jnp.sum(e_proj * params["attn_e"][0], axis=-1)   # (T, H)

    # dense edge code: etype on real edges, sentinel T on non-edges
    code = jnp.where(adj > 0, etype_mat, T).astype(jnp.int32)   # (N, N) int32

    res = gat_attention(fsrc_flat, el_t, er, code, ee_table,
                        num_heads=H, out_feats=F,
                        negative_slope=negative_slope,
                        return_attention=return_attention)

    # TODO(synk): residual / bias_param / activation / res_attn-alpha blending are
    # disabled by module defaults; dropout with p=0 is the identity.
    if return_attention:
        out_flat, attn = res
        return out_flat.reshape(N, H, F), attn   # attn == dense graph.edata['a']
    return res.reshape(N, H, F)


# ----------------------------- pure-JAX reference --------------------------- #

def reference_forward(params, feat, etype_mat, adj, *, num_heads, out_feats,
                      edge_feats, slope=0.2):
    N = feat.shape[0]
    H, F, EF = num_heads, out_feats, edge_feats
    feat_src = (feat @ params["W_fc_t"]).reshape(N, H, F)
    el = jnp.sum(feat_src * params["attn_l"], axis=-1)          # (N, H)
    er = jnp.sum(feat_src * params["attn_r"], axis=-1)          # (N, H)
    e_proj = (params["edge_emb"] @ params["W_e_t"]).reshape(-1, H, EF)
    ee_type = jnp.sum(e_proj * params["attn_e"], axis=-1)       # (T, H)
    ee = ee_type[etype_mat]                                     # (Nd, Ns, H)
    logits = el[None, :, :] + er[:, None, :] + ee
    logits = jnp.where(logits > 0, logits, slope * logits)
    adjf = adj.astype(jnp.float32)[:, :, None]
    masked = jnp.where(adjf > 0, logits, -1e30)
    m = jnp.max(masked, axis=1, keepdims=True)
    p = jnp.exp(masked - m) * adjf
    a = p / jnp.sum(p, axis=1, keepdims=True)
    rst = jnp.einsum("dsh,shf->dhf", a, feat_src)
    return rst, jnp.transpose(a, (2, 0, 1))


# ------------------------------------ main ----------------------------------- #

if __name__ == "__main__":
    key = jax.random.PRNGKey(0)
    # nodes, in_feats, out_feats, heads, edge_feats, num_etypes (H*F = 128: lane-dense)
    N, Din, F, H, EF, T = 256, 64, 32, 4, 8, 8

    kp, kf, ka, ke = jax.random.split(key, 4)
    params = init_params(kp, Din, F, H, EF, T)
    feat = jax.random.normal(kf, (N, Din), dtype=jnp.float32)

    adj = (jax.random.uniform(ka, (N, N)) < 0.15).astype(jnp.float32)
    adj = jnp.maximum(adj, jnp.eye(N, dtype=jnp.float32))   # self loops: no 0-in-degree
    etype_mat = jax.random.randint(ke, (N, N), 0, T, dtype=jnp.int32)

    # fast path: attention matrix not materialized (res_attn is unused by defaults)
    rst = my_gat_conv_forward(params, feat, etype_mat, adj,
                              num_heads=H, out_feats=F, edge_feats=EF)
    # full path: also emit the dense equivalent of graph.edata['a']
    rst2, attn = my_gat_conv_forward(params, feat, etype_mat, adj,
                                     num_heads=H, out_feats=F, edge_feats=EF,
                                     return_attention=True)
    jax.block_until_ready((rst, rst2, attn))

    rst_ref, attn_ref = reference_forward(params, feat, etype_mat, adj,
                                          num_heads=H, out_feats=F, edge_feats=EF)
    # tolerances account for bf16 MXU operands + approx reciprocal in the kernel
    np.testing.assert_allclose(np.asarray(rst), np.asarray(rst_ref), rtol=5e-2, atol=5e-2)
    np.testing.assert_allclose(np.asarray(rst2), np.asarray(rst_ref), rtol=5e-2, atol=5e-2)
    np.testing.assert_allclose(np.asarray(attn), np.asarray(attn_ref), rtol=5e-2, atol=1e-2)

    print("KERNEL_OK")
</pallas_src>

<mosaic_0001>
module attributes {stable_mosaic.version = 11 : i64} {
  func.func @_matmul_kernel(%arg0: i32, %arg1: i32, %arg2: i32, %arg3: memref<128x64xbf16, #tpu.memory_space<vmem>>, %arg4: memref<64x136xbf16, #tpu.memory_space<vmem>>, %arg5: memref<128x136xf32, #tpu.memory_space<vmem>>, %arg6: memref<128x136xf32, #tpu.memory_space<vmem>>) attributes {dimension_semantics = [#tpu.dimension_semantics<parallel>, #tpu.dimension_semantics<parallel>, #tpu.dimension_semantics<arbitrary>], iteration_bounds = array<i64: 2, 1, 1>, scalar_prefetch = 0 : i64, scratch_operands = 1 : i64, tpu.core_type = #tpu.core_type<tc>, window_params = [{transform_indices = @transform_0, window_bounds = array<i64: 128, 64>}, {transform_indices = @transform_1, window_bounds = array<i64: 64, 136>}, {transform_indices = @transform_2, window_bounds = array<i64: 128, 136>}]} {
    %c0_i32 = arith.constant 0 : i32
    %0 = arith.cmpi eq, %arg2, %c0_i32 : i32
    %1 = arith.extui %0 : i1 to i32
    %c0_i32_0 = arith.constant 0 : i32
    %2 = arith.cmpi ne, %1, %c0_i32_0 : i32
    scf.if %2 {
      %cst_10 = arith.constant 0.000000e+00 : f32
      %12 = vector.broadcast %cst_10 : f32 to vector<128x136xf32>
      %c0_11 = arith.constant 0 : index
      %c0_12 = arith.constant 0 : index
      %13 = vector.load %arg6[%c0_11, %c0_12] : memref<128x136xf32, #tpu.memory_space<vmem>>, vector<128x136xf32>
      tpu.vector_store %arg6[%c0_11, %c0_12], %12 {strides = array<i32>} : memref<128x136xf32, #tpu.memory_space<vmem>>, vector<128x136xf32>,
    } else {
    }
    %c0 = arith.constant 0 : index
    %c0_1 = arith.constant 0 : index
    %3 = vector.load %arg6[%c0, %c0_1] : memref<128x136xf32, #tpu.memory_space<vmem>>, vector<128x136xf32>
    %c0_2 = arith.constant 0 : index
    %c0_3 = arith.constant 0 : index
    %4 = vector.load %arg3[%c0_2, %c0_3] : memref<128x64xbf16, #tpu.memory_space<vmem>>, vector<128x64xbf16>
    %c0_4 = arith.constant 0 : index
    %c0_5 = arith.constant 0 : index
    %5 = vector.load %arg4[%c0_4, %c0_5] : memref<64x136xbf16, #tpu.memory_space<vmem>>, vector<64x136xbf16>
    %cst = arith.constant dense<0.000000e+00> : vector<128x136xf32>
    %6 = tpu.matmul %4, %5, %cst {dimension_numbers = #tpu.dot_dimension_numbers<[1], [0], [0], [1], [0, 0, 1, 1], [], []>} : vector<128x64xbf16>, vector<64x136xbf16>, vector<128x136xf32> -> vector<128x136xf32>
    %7 = arith.addf %3, %6 : vector<128x136xf32>
    %c0_6 = arith.constant 0 : index
    %c0_7 = arith.constant 0 : index
    %8 = vector.load %arg6[%c0_6, %c0_7] : memref<128x136xf32, #tpu.memory_space<vmem>>, vector<128x136xf32>
    tpu.vector_store %arg6[%c0_6, %c0_7], %7 {strides = array<i32>} : memref<128x136xf32, #tpu.memory_space<vmem>>, vector<128x136xf32>,
    %c0_i32_8 = arith.constant 0 : i32
    %9 = arith.cmpi eq, %arg2, %c0_i32_8 : i32
    %10 = arith.extui %9 : i1 to i32
    %c0_i32_9 = arith.constant 0 : i32
    %11 = arith.cmpi ne, %10, %c0_i32_9 : i32
    scf.if %11 {
      %c0_10 = arith.constant 0 : index
      %c0_11 = arith.constant 0 : index
      %12 = vector.load %arg6[%c0_10, %c0_11] : memref<128x136xf32, #tpu.memory_space<vmem>>, vector<128x136xf32>
      %c0_12 = arith.constant 0 : index
      %c0_13 = arith.constant 0 : index
      %13 = vector.load %arg5[%c0_12, %c0_13] : memref<128x136xf32, #tpu.memory_space<vmem>>, vector<128x136xf32>
      tpu.vector_store %arg5[%c0_12, %c0_13], %12 {strides = array<i32>} : memref<128x136xf32, #tpu.memory_space<vmem>>, vector<128x136xf32>,
    } else {
    }
    return
  }
  func.func @transform_0(%arg0: i32, %arg1: i32, %arg2: i32) -> (i32, i32) {
    %c0_i32 = arith.constant 0 : i32
    return %arg0, %arg2 : i32, i32
  }
  func.func @transform_1(%arg0: i32, %arg1: i32, %arg2: i32) -> (i32, i32) {
    %c0_i32 = arith.constant 0 : i32
    return %arg2, %arg1 : i32, i32
  }
  func.func @transform_2(%arg0: i32, %arg1: i32, %arg2: i32) -> (i32, i32) {
    %c0_i32 = arith.constant 0 : i32
    return %arg0, %arg1 : i32, i32
  }
}

</mosaic_0001>

<llo_original>
// kernel: tpu_custom_call.1
$region0: #{tpu_custom_call.1}
  #allocation0 [shape = 'u32[]', space=smem, size = 0x4, offset = 0x4, fixed_abs, tag = 'smem constant byte address 0x4 - core index']
  #allocation1 [shape = 'u32[144,128]{1,0:T(1,128)}', space=vmem, size = 0x12000, scoped, tag = 'internal scratch']
  #allocation2 [shape = 'f32[128,136]{1,0:T(8,128)}', space=vmem, size = 0x20000, scoped, tag = 'scratch operand']
  %s0 = inlined_call_operand.vmem [shape: bf16[256,64], index: 0, kind: input, shape index: {}]
  %s1 = inlined_call_operand.vmem [shape: bf16[64,136], index: 1, kind: input, shape index: {}]
  %s2 = inlined_call_operand.vmem [shape: f32[256,136], index: 2, kind: output, shape index: {}]
  %s3 = sld [smem:[#allocation0]]
  $region49: #{tpu_custom_call.1} parent=0
    _
  %s5 = ssub.s32 1, %s3
  %s6 = scalar_select 0, %s5, %s3
  loop: start=0, step=1, limit=4
  $region2: #{tpu_custom_call.1} parent=0 // loop_pre_header
    _
  $region3: #{tpu_custom_call.1} parent=0 // loop_header
    %s8 = sphi 0, %s12
    %p9 = scmp.ge.s32.totalorder %s8, 4
    %s15 = sphi 0, %s34
    %s16 = sphi 0, %s30
    %s17 = sphi 0, %s26
    %s18 = sphi 0, %s15
    %s19 = sphi 0, %s16
    %s20 = sphi 0, %s17
    %s21 = sphi 0, %s18
    %s22 = sphi 0, %s19
    %s23 = sphi 0, %s20
    %s39 = sphi 0, %s41
    %s42 = sphi 0, %s39
    %s43 = sphi 0, %s42
    %s59 = sphi 0, %s43
    %s67 = sphi 0, %s69
    %s70 = sphi 0, %s67
    %s71 = sphi 0, %s70
    %s87 = sphi 0, %s71
    %s95 = sphi 0, %s97
    %s98 = sphi 0, %s95
    %s99 = sphi 0, %s98
    %s115 = sphi 0, %s99
  $region4: #{tpu_custom_call.1} parent=0 // loop_header_branch
    %11 = sbr.rel (%p9) target = $region8
  $region5: #{tpu_custom_call.1} parent=0 // loop_body
    %s13 = ssub.s32 %s8, 1
    %s14 = ssub.s32 %s8, 2
    %s24 = sadd.s32 1, %s17
    %p25 = scmp.ge.s32.totalorder %s24, 1
    %s26 = scalar_select %p25, 0, %s24
    %s27 = sadd.s32 1, %s16
    %s28 = scalar_select %p25, %s27, %s16
    %p29 = scmp.ge.s32.totalorder %s28, 1
    %s30 = scalar_select %p29, 0, %s28
    %s31 = sadd.s32 1, %s15
    %s32 = scalar_select %p29, %s31, %s15
    %p33 = scmp.ge.s32.totalorder %s32, 2
    %s34 = scalar_select %p33, 0, %s32
    %s35 = ssub.s32 %s15, %s34
    %s36 = ssub.s32 %s17, %s26
    %s37 = sor.u32 %s35, %s36
    %p38 = scmp.eq.s32.totalorder %s37, 0
    %s40 = sadd.s32 %s39, 1
    %s41 = scalar_select %p38, %s39, %s40
    %p44 = pneg %p38
    %p45 = scmp.eq.s32.totalorder %s8, 1
    %p46 = por %p44, %p45
    %p47 = scmp.ne.s32.totalorder %s39, %s42
    %p48 = scmp.eq.s32.totalorder %s8, 0
    %p49 = por %p47, %p48
    %p50 = scmp.ne.s32.totalorder %s39, %s42
    %p51 = scmp.eq.s32.totalorder %s13, 1
    %p52 = por %p50, %p51
    %p53 = scmp.ne.s32.totalorder %s42, %s43
    %p54 = scmp.eq.s32.totalorder %s13, 0
    %p55 = por %p53, %p54
    %p56 = scmp.ne.s32.totalorder %s42, %s43
    %p57 = scmp.eq.s32.totalorder %s14, 1
    %p58 = por %p56, %p57
    %p60 = scmp.ne.s32.totalorder %s43, %s59
    %p61 = scmp.eq.s32.totalorder %s14, 0
    %p62 = por %p60, %p61
    %s63 = ssub.s32 %s17, %s26
    %s64 = ssub.s32 %s16, %s30
    %s65 = sor.u32 %s63, %s64
    %p66 = scmp.eq.s32.totalorder %s65, 0
    %s68 = sadd.s32 %s67, 1
    %s69 = scalar_select %p66, %s67, %s68
    %p72 = pneg %p66
    %p73 = scmp.eq.s32.totalorder %s8, 1
    %p74 = por %p72, %p73
    %p75 = scmp.ne.s32.totalorder %s67, %s70
    %p76 = scmp.eq.s32.totalorder %s8, 0
    %p77 = por %p75, %p76
    %p78 = scmp.ne.s32.totalorder %s67, %s70
    %p79 = scmp.eq.s32.totalorder %s13, 1
    %p80 = por %p78, %p79
    %p81 = scmp.ne.s32.totalorder %s70, %s71
    %p82 = scmp.eq.s32.totalorder %s13, 0
    %p83 = por %p81, %p82
    %p84 = scmp.ne.s32.totalorder %s70, %s71
    %p85 = scmp.eq.s32.totalorder %s14, 1
    %p86 = por %p84, %p85
    %p88 = scmp.ne.s32.totalorder %s71, %s87
    %p89 = scmp.eq.s32.totalorder %s14, 0
    %p90 = por %p88, %p89
    %s91 = ssub.s32 %s15, %s34
    %s92 = ssub.s32 %s16, %s30
    %s93 = sor.u32 %s91, %s92
    %p94 = scmp.eq.s32.totalorder %s93, 0
    %s96 = sadd.s32 %s95, 1
    %s97 = scalar_select %p94, %s95, %s96
    %p100 = pneg %p94
    %p101 = scmp.eq.s32.totalorder %s8, 1
    %p102 = por %p100, %p101
    %p103 = scmp.ne.s32.totalorder %s95, %s98
    %p104 = scmp.eq.s32.totalorder %s8, 0
    %p105 = por %p103, %p104
    %p106 = scmp.ne.s32.totalorder %s95, %s98
    %p107 = scmp.eq.s32.totalorder %s13, 1
    %p108 = por %p106, %p107
    %p109 = scmp.ne.s32.totalorder %s98, %s99
    %p110 = scmp.eq.s32.totalorder %s13, 0
    %p111 = por %p109, %p110
    %p112 = scmp.ne.s32.totalorder %s98, %s99
    %p113 = scmp.eq.s32.totalorder %s14, 1
    %p114 = por %p112, %p113
    %p116 = scmp.ne.s32.totalorder %s99, %s115
    %p117 = scmp.eq.s32.totalorder %s14, 0
    %p118 = por %p116, %p117
    %p119 = scmp.le.s32.totalorder 1, %s8
    %p120 = scmp.lt.s32.totalorder %s8, 3
    %p121 = pnand %p119, %p120
    %p122 = pneg %p121
    // Predicated region
    $region9: #{tpu_custom_call.1} parent=5 // pred_check
      _
    $region10: #{tpu_custom_call.1} parent=5 // pred_check_branch
      %124 = sbr.rel (%p121) target = $region12
    $region11: #{tpu_custom_call.1} parent=5 // pred_region
      %s125 = ssub.s32 %s8, 1
      // Predicated region
      $region13: #{tpu_custom_call.1} parent=11 // pred_check
        %p126 = pneg %p83
      $region14: #{tpu_custom_call.1} parent=11 // pred_check_branch
        %128 = sbr.rel (%p126) target = $region16
      $region15: #{tpu_custom_call.1} parent=11 // pred_region
        %s129 = smul.u32 8, %s20
        %s130 = smul.u32 2, %s19
        %p131 = scmp.lt.s32.totalorder %s129, 7
        %s132 = scalar_select %p131, %s129, 7
        %p133 = scmp.lt.s32.totalorder %s130, 1
        %s134 = scalar_select %p133, %s130, 1
        %s135 = smul.addr %s132, 2
        %s136 = sadd.s32 %s134, %s135
        %s137 = smul.addr %s136, 4
        %s138 = scalar_lea.vmem %s1, %s137
        %s139 = smul.u32 8, %s20
        %s140 = smul.u32 2, %s19
      $region16: #{tpu_custom_call.1} parent=11 // pred_fallthru
        _
    $region12: #{tpu_custom_call.1} parent=5 // pred_fallthru
      _
    %p141 = scmp.lt.s32.totalorder %s8, 2
    // Predicated region
    $region17: #{tpu_custom_call.1} parent=5 // pred_check
      %p142 = pneg %p141
    $region18: #{tpu_custom_call.1} parent=5 // pred_check_branch
      %144 = sbr.rel (%p142) target = $region20
    $region19: #{tpu_custom_call.1} parent=5 // pred_region
      // Predicated region
      $region21: #{tpu_custom_call.1} parent=19 // pred_check
        %p145 = pneg %p49
      $region22: #{tpu_custom_call.1} parent=19 // pred_check_branch
        %147 = sbr.rel (%p145) target = $region24
      $region23: #{tpu_custom_call.1} parent=19 // pred_region
        %s148 = smul.u32 16, %s15
        %p149 = scmp.lt.s32.totalorder %s148, 31
        %s150 = scalar_select %p149, %s148, 31
        %p151 = scmp.lt.s32.totalorder %s17, 0
        %s152 = scalar_select %p151, %s17, 0
        %s153 = sadd.s32 %s152, %s150
        %s154 = smul.addr %s153, 4
        %s155 = scalar_lea.vmem %s0, %s154
        %s156 = smul.u32 16, %s15
      $region24: #{tpu_custom_call.1} parent=19 // pred_fallthru
        _
    $region20: #{tpu_custom_call.1} parent=5 // pred_fallthru
      _
    %p157 = scmp.le.s32.totalorder 1, %s8
    %p158 = scmp.lt.s32.totalorder %s8, 3
    %p159 = pnand %p157, %p158
    %p160 = pneg %p159
    // Predicated region
    $region25: #{tpu_custom_call.1} parent=5 // pred_check
      _
    $region26: #{tpu_custom_call.1} parent=5 // pred_check_branch
      %162 = sbr.rel (%p159) target = $region28
    $region27: #{tpu_custom_call.1} parent=5 // pred_region
      %s163 = ssub.s32 %s8, 1
      %s164 = smul.u32 16, %s18
      %p165 = scmp.lt.s32.totalorder %s164, 31
      %s166 = scalar_select %p165, %s164, 31
      %p167 = scmp.lt.s32.totalorder %s20, 0
      %s168 = scalar_select %p167, %s20, 0
      %s169 = sadd.s32 %s168, %s166
      %s170 = smul.addr %s169, 4
      %s171 = scalar_lea.vmem %s0, %s170
      %p172 = pneg %p55
      %p173 = pneg %p52
      %s174 = smul.u32 8, %s20
      %s175 = smul.u32 2, %s19
      %p176 = scmp.lt.s32.totalorder %s174, 7
      %s177 = scalar_select %p176, %s174, 7
      %p178 = scmp.lt.s32.totalorder %s175, 1
      %s179 = scalar_select %p178, %s175, 1
      %s180 = smul.addr %s177, 2
      %s181 = sadd.s32 %s179, %s180
      %s182 = smul.addr %s181, 4
      %s183 = scalar_lea.vmem %s1, %s182
      %p184 = pneg %p83
      %p185 = pneg %p80
      %p186 = pneg %p111
      %p187 = pneg %p108
      %s188 = smul.u32 16, %s18
      %s189 = smul.u32 2, %s19
      %p190 = scmp.lt.s32.totalorder %s188, 31
      %s191 = scalar_select %p190, %s188, 31
      %p192 = scmp.lt.s32.totalorder %s189, 1
      %s193 = scalar_select %p192, %s189, 1
      %s194 = smul.addr %s191, 2
      %s195 = sadd.s32 %s193, %s194
      %s196 = smul.addr %s195, 8
      %s197 = scalar_lea.vmem %s2, %s196
      %s198 = smul.u32 16, %s18
      %p199 = scmp.lt.s32.totalorder %s198, 31
      %s200 = scalar_select %p199, %s198, 31
      %p201 = scmp.lt.s32.totalorder %s20, 0
      %s202 = scalar_select %p201, %s20, 0
      %s203 = sadd.s32 %s202, %s200
      %s204 = smul.addr %s203, 4
      %s205 = scalar_lea.vmem %s0, %s204
      %s206 = smul.u32 16, %s18
      %s207 = smul.u32 8, %s20
      %s208 = smul.u32 2, %s19
      %p209 = scmp.lt.s32.totalorder %s207, 7
      %s210 = scalar_select %p209, %s207, 7
      %p211 = scmp.lt.s32.totalorder %s208, 1
      %s212 = scalar_select %p211, %s208, 1
      %s213 = smul.addr %s210, 2
      %s214 = sadd.s32 %s212, %s213
      %s215 = smul.addr %s214, 4
      %s216 = scalar_lea.vmem %s1, %s215
      %s217 = smul.u32 8, %s20
      %s218 = smul.u32 2, %s19
      %s219 = smul.u32 16, %s18
      %s220 = smul.u32 2, %s19
      %p221 = scmp.lt.s32.totalorder %s219, 31
      %s222 = scalar_select %p221, %s219, 31
      %p223 = scmp.lt.s32.totalorder %s220, 1
      %s224 = scalar_select %p223, %s220, 1
      %s225 = smul.addr %s222, 2
      %s226 = sadd.s32 %s224, %s225
      %s227 = smul.addr %s226, 8
      %s228 = scalar_lea.vmem %s2, %s227
      %s229 = smul.u32 16, %s18
      %s230 = smul.u32 2, %s19
      %p232 = scmp.eq.s32.totalorder %s20, 0
      // Predicated region
      $region29: #{tpu_custom_call.1} parent=27 // pred_check
        %p233 = pneg %p232
      $region30: #{tpu_custom_call.1} parent=27 // pred_check_branch
        %235 = sbr.rel (%p233) target = $region32
      $region31: #{tpu_custom_call.1} parent=27 // pred_region
        %236 = vst [vmem:[#allocation2] sm:$0xff] 0.0
        %vm237 = vcmask 64512
        %238 = vst.msk [vmem:[#allocation2 + $0x8] sm:$0xff] %vm237, 0.0
        %239 = vst [vmem:[#allocation2 + $0x10] sm:$0xff] 0.0
        %240 = vst.msk [vmem:[#allocation2 + $0x18] sm:$0xff] %vm237, 0.0
        %241 = vst [vmem:[#allocation2 + $0x20] sm:$0xff] 0.0
        %242 = vst.msk [vmem:[#allocation2 + $0x28] sm:$0xff] %vm237, 0.0
        %243 = vst [vmem:[#allocation2 + $0x30] sm:$0xff] 0.0
        %244 = vst.msk [vmem:[#allocation2 + $0x38] sm:$0xff] %vm237, 0.0
        %245 = vst [vmem:[#allocation2 + $0x40] sm:$0xff] 0.0
        %246 = vst.msk [vmem:[#allocation2 + $0x48] sm:$0xff] %vm237, 0.0
        %247 = vst [vmem:[#allocation2 + $0x50] sm:$0xff] 0.0
        %248 = vst.msk [vmem:[#allocation2 + $0x58] sm:$0xff] %vm237, 0.0
        %249 = vst [vmem:[#allocation2 + $0x60] sm:$0xff] 0.0
        %250 = vst.msk [vmem:[#allocation2 + $0x68] sm:$0xff] %vm237, 0.0
        %251 = vst [vmem:[#allocation2 + $0x70] sm:$0xff] 0.0
        %252 = vst.msk [vmem:[#allocation2 + $0x78] sm:$0xff] %vm237, 0.0
        %253 = vst [vmem:[#allocation2 + $0x80] sm:$0xff] 0.0
        %254 = vst.msk [vmem:[#allocation2 + $0x88] sm:$0xff] %vm237, 0.0
        %255 = vst [vmem:[#allocation2 + $0x90] sm:$0xff] 0.0
        %256 = vst.msk [vmem:[#allocation2 + $0x98] sm:$0xff] %vm237, 0.0
        %257 = vst [vmem:[#allocation2 + $0xa0] sm:$0xff] 0.0
        %258 = vst.msk [vmem:[#allocation2 + $0xa8] sm:$0xff] %vm237, 0.0
        %259 = vst [vmem:[#allocation2 + $0xb0] sm:$0xff] 0.0
        %260 = vst.msk [vmem:[#allocation2 + $0xb8] sm:$0xff] %vm237, 0.0
        %261 = vst [vmem:[#allocation2 + $0xc0] sm:$0xff] 0.0
        %262 = vst.msk [vmem:[#allocation2 + $0xc8] sm:$0xff] %vm237, 0.0
        %263 = vst [vmem:[#allocation2 + $0xd0] sm:$0xff] 0.0
        %264 = vst.msk [vmem:[#allocation2 + $0xd8] sm:$0xff] %vm237, 0.0
        %265 = vst [vmem:[#allocation2 + $0xe0] sm:$0xff] 0.0
        %266 = vst.msk [vmem:[#allocation2 + $0xe8] sm:$0xff] %vm237, 0.0
        %267 = vst [vmem:[#allocation2 + $0xf0] sm:$0xff] 0.0
        %268 = vst.msk [vmem:[#allocation2 + $0xf8] sm:$0xff] %vm237, 0.0
      $region32: #{tpu_custom_call.1} parent=27 // pred_fallthru
        _
      %v269 = vld [vmem:[#allocation2] sm:$0xff]
      %v270 = vld [vmem:[#allocation2 + $0x8] sm:$0xff]
      %v271 = vld [vmem:[#allocation2 + $0x10] sm:$0xff]
      %v272 = vld [vmem:[#allocation2 + $0x18] sm:$0xff]
      %v273 = vld [vmem:[#allocation2 + $0x20] sm:$0xff]
      %v274 = vld [vmem:[#allocation2 + $0x28] sm:$0xff]
      %v275 = vld [vmem:[#allocation2 + $0x30] sm:$0xff]
      %v276 = vld [vmem:[#allocation2 + $0x38] sm:$0xff]
      %v277 = vld [vmem:[#allocation2 + $0x40] sm:$0xff]
      %v278 = vld [vmem:[#allocation2 + $0x48] sm:$0xff]
      %v279 = vld [vmem:[#allocation2 + $0x50] sm:$0xff]
      %v280 = vld [vmem:[#allocation2 + $0x58] sm:$0xff]
      %v281 = vld [vmem:[#allocation2 + $0x60] sm:$0xff]
      %v282 = vld [vmem:[#allocation2 + $0x68] sm:$0xff]
      %v283 = vld [vmem:[#allocation2 + $0x70] sm:$0xff]
      %v284 = vld [vmem:[#allocation2 + $0x78] sm:$0xff]
      %v285 = vld [vmem:[#allocation2 + $0x80] sm:$0xff]
      %v286 = vld [vmem:[#allocation2 + $0x88] sm:$0xff]
      %v287 = vld [vmem:[#allocation2 + $0x90] sm:$0xff]
      %v288 = vld [vmem:[#allocation2 + $0x98] sm:$0xff]
      %v289 = vld [vmem:[#allocation2 + $0xa0] sm:$0xff]
      %v290 = vld [vmem:[#allocation2 + $0xa8] sm:$0xff]
      %v291 = vld [vmem:[#allocation2 + $0xb0] sm:$0xff]
      %v292 = vld [vmem:[#allocation2 + $0xb8] sm:$0xff]
      %v293 = vld [vmem:[#allocation2 + $0xc0] sm:$0xff]
      %v294 = vld [vmem:[#allocation2 + $0xc8] sm:$0xff]
      %v295 = vld [vmem:[#allocation2 + $0xd0] sm:$0xff]
      %v296 = vld [vmem:[#allocation2 + $0xd8] sm:$0xff]
      %v297 = vld [vmem:[#allocation2 + $0xe0] sm:$0xff]
      %v298 = vld [vmem:[#allocation2 + $0xe8] sm:$0xff]
      %v299 = vld [vmem:[#allocation2 + $0xf0] sm:$0xff]
      %v300 = vld [vmem:[#allocation2 + $0xf8] sm:$0xff]
      %v301 = vld [vmem:[%s205] sm:$0xf]
      %v302 = vld [vmem:[%s205 + $0x4] sm:$0xf]
      %v303 = vld [vmem:[%s205 + $0x8] sm:$0xf]
      %v304 = vld [vmem:[%s205 + $0xc] sm:$0xf]
      %v305 = vld [vmem:[%s205 + $0x10] sm:$0xf]
      %v306 = vld [vmem:[%s205 + $0x14] sm:$0xf]
      %v307 = vld [vmem:[%s205 + $0x18] sm:$0xf]
      %v308 = vld [vmem:[%s205 + $0x1c] sm:$0xf]
      %v309 = vld [vmem:[%s205 + $0x20] sm:$0xf]
      %v310 = vld [vmem:[%s205 + $0x24] sm:$0xf]
      %v311 = vld [vmem:[%s205 + $0x28] sm:$0xf]
      %v312 = vld [vmem:[%s205 + $0x2c] sm:$0xf]
      %v313 = vld [vmem:[%s205 + $0x30] sm:$0xf]
      %v314 = vld [vmem:[%s205 + $0x34] sm:$0xf]
      %v315 = vld [vmem:[%s205 + $0x38] sm:$0xf]
      %v316 = vld [vmem:[%s205 + $0x3c] sm:$0xf]
      %v317 = vld [vmem:[%s216] sm:$0xff]
      %v318 = vld [vmem:[%s216 + $0x8] sm:$0xff]
      %v319 = vld [vmem:[%s216 + $0x10] sm:$0xff]
      %v320 = vld [vmem:[%s216 + $0x18] sm:$0xff]
      %v321 = vld [vmem:[%s216 + $0x20] sm:$0xff]
      %v322 = vld [vmem:[%s216 + $0x28] sm:$0xff]
      %v323 = vld [vmem:[%s216 + $0x30] sm:$0xff]
      %v324 = vld [vmem:[%s216 + $0x38] sm:$0xff]
      %v341 = vunpack.c.l.b16 %v301
      %v342 = vunpack.c.l.b16 %v302
      %v343 = vunpack.c.l.b16 %v303
      %v344 = vunpack.c.l.b16 %v304
      %v345 = vunpack.c.l.b16 %v305
      %v346 = vunpack.c.l.b16 %v306
      %v347 = vunpack.c.l.b16 %v307
      %v348 = vunpack.c.l.b16 %v308
      %v349 = vunpack.c.l.b16 %v309
      %v350 = vunpack.c.l.b16 %v310
      %v351 = vunpack.c.l.b16 %v311
      %v352 = vunpack.c.l.b16 %v312
      %v353 = vunpack.c.l.b16 %v313
      %v354 = vunpack.c.l.b16 %v314
      %v355 = vunpack.c.l.b16 %v315
      %v356 = vunpack.c.l.b16 %v316
      %v357 = vpack.c.b16 %v342, %v341
      %v358 = vpack.c.b16 %v344, %v343
      %v359 = vpack.c.b16 %v346, %v345
      %v360 = vpack.c.b16 %v348, %v347
      %v361 = vpack.c.b16 %v350, %v349
      %v362 = vpack.c.b16 %v352, %v351
      %v363 = vpack.c.b16 %v354, %v353
      %v364 = vpack.c.b16 %v356, %v355
      %v373 = vunpack.c.l.b16 %v317
      %v374 = vunpack.c.h.b16 %v317
      %v375 = vunpack.c.l.b16 %v318
      %v376 = vunpack.c.h.b16 %v318
      %v377 = vunpack.c.l.b16 %v319
      %v378 = vunpack.c.h.b16 %v319
      %v379 = vunpack.c.l.b16 %v320
      %v380 = vunpack.c.h.b16 %v320
      %v381 = vunpack.c.l.b16 %v321
      %v382 = vunpack.c.h.b16 %v321
      %v383 = vunpack.c.l.b16 %v322
      %v384 = vunpack.c.h.b16 %v322
      %v385 = vunpack.c.l.b16 %v323
      %v386 = vunpack.c.h.b16 %v323
      %v387 = vunpack.c.l.b16 %v324
      %v388 = vunpack.c.h.b16 %v324
      %v389 = vpack.c.b16 %v375, %v373
      %v390 = vpack.c.b16 %v376, %v374
      %v391 = vpack.c.b16 %v379, %v377
      %v392 = vpack.c.b16 %v380, %v378
      %v393 = vpack.c.b16 %v383, %v381
      %v394 = vpack.c.b16 %v384, %v382
      %v395 = vpack.c.b16 %v387, %v385
      %v396 = vpack.c.b16 %v388, %v386
      %vm405 = vcmask 523264
      %v407 = vsel %vm405, %v357, 0
      %v410 = vsel %vm405, %v358, 0
      %v413 = vsel %vm405, %v359, 0
      %v416 = vsel %vm405, %v360, 0
      %v419 = vsel %vm405, %v361, 0
      %v422 = vsel %vm405, %v362, 0
      %v425 = vsel %vm405, %v363, 0
      %v428 = vsel %vm405, %v364, 0
      %430 = vmatprep.subr.bf16.mxu0 %v390
      %431 = vmatpush1.bf16.msra.mxu0 %v389
      %432 = vmatprep.subr.bf16.mxu0 %v392
      %433 = vmatpush1.bf16.msra.mxu0 %v391
      %434 = vmatprep.subr.bf16.mxu0 %v394
      %435 = vmatpush1.bf16.msra.mxu0 %v393
      %436 = vmatprep.subr.bf16.mxu0 %v396
      %437 = vmatpush1.bf16.msra.mxu0 %v395
      %438 = vmatprep.subr.bf16.mxu0 0
      %439 = vmatpush1.bf16.msra.mxu0 0
      %440 = vmatprep.subr.bf16.mxu0 0
      %441 = vmatpush1.bf16.msra.mxu0 0
      %442 = vmatprep.subr.bf16.mxu0 0
      %443 = vmatpush1.bf16.msra.mxu0 0
      %444 = vmatprep.subr.bf16.mxu0 0
      %445 = vmatpush1.bf16.msra.mxu0 0
      %446 = vmatprep.subr.bf16.mxu0 0
      %447 = vmatpush1.bf16.msra.mxu0 0
      %448 = vmatprep.subr.bf16.mxu0 0
      %449 = vmatpush1.bf16.msra.mxu0 0
      %450 = vmatprep.subr.bf16.mxu0 0
      %451 = vmatpush1.bf16.msra.mxu0 0
      %452 = vmatprep.subr.bf16.mxu0 0
      %453 = vmatpush1.bf16.msra.mxu0 0
      %454 = vmatprep.subr.bf16.mxu0 0
      %455 = vmatpush1.bf16.msra.mxu0 0
      %456 = vmatprep.subr.bf16.mxu0 0
      %457 = vmatpush1.bf16.msra.mxu0 0
      %458 = vmatprep.subr.bf16.mxu0 0
      %459 = vmatpush1.bf16.msra.mxu0 0
      %460 = vmatprep.subr.bf16.mxu0 0
      %461 = vmatpush1.bf16.msra.mxu0 0
      %462 = vmatprep.mubr.bf16.mxu0 0
      %463 = vmatmul.mubr.bf16.gmra.mrb[0].mxu0 %v407
      %v464 = vpop.f32.mrb[0].mxu0
      %v465 = vadd.f32 0.0, %v464
      %v466 = vpop.f32.mrb[0].mxu0
      %v467 = vadd.f32 0.0, %v466
      %v468 = vpop.f32.mrb[0].mxu0
      %v469 = vadd.f32 0.0, %v468
      %v470 = vpop.f32.mrb[0].mxu0
      %v471 = vadd.f32 0.0, %v470
      %472 = vmatprep.mubr.bf16.mxu0 0
      %473 = vmatmul.mubr.bf16.gmra.mrb[0].mxu0 %v410
      %v474 = vpop.f32.mrb[0].mxu0
      %v475 = vadd.f32 0.0, %v474
      %v476 = vpop.f32.mrb[0].mxu0
      %v477 = vadd.f32 0.0, %v476
      %v478 = vpop.f32.mrb[0].mxu0
      %v479 = vadd.f32 0.0, %v478
      %v480 = vpop.f32.mrb[0].mxu0
      %v481 = vadd.f32 0.0, %v480
      %482 = vmatprep.mubr.bf16.mxu0 0
      %483 = vmatmul.mubr.bf16.gmra.mrb[0].mxu0 %v413
      %v484 = vpop.f32.mrb[0].mxu0
      %v485 = vadd.f32 0.0, %v484
      %v486 = vpop.f32.mrb[0].mxu0
      %v487 = vadd.f32 0.0, %v486
      %v488 = vpop.f32.mrb[0].mxu0
      %v489 = vadd.f32 0.0, %v488
      %v490 = vpop.f32.mrb[0].mxu0
      %v491 = vadd.f32 0.0, %v490
      %492 = vmatprep.mubr.bf16.mxu0 0
      %493 = vmatmul.mubr.bf16.gmra.mrb[0].mxu0 %v416
      %v494 = vpop.f32.mrb[0].mxu0
      %v495 = vadd.f32 0.0, %v494
      %v496 = vpop.f32.mrb[0].mxu0
      %v497 = vadd.f32 0.0, %v496
      %v498 = vpop.f32.mrb[0].mxu0
      %v499 = vadd.f32 0.0, %v498
      %v500 = vpop.f32.mrb[0].mxu0
      %v501 = vadd.f32 0.0, %v500
      %502 = vmatprep.mubr.bf16.mxu0 0
      %503 = vmatmul.mubr.bf16.gmra.mrb[0].mxu0 %v419
      %v504 = vpop.f32.mrb[0].mxu0
      %v505 = vadd.f32 0.0, %v504
      %v506 = vpop.f32.mrb[0].mxu0
      %v507 = vadd.f32 0.0, %v506
      %v508 = vpop.f32.mrb[0].mxu0
      %v509 = vadd.f32 0.0, %v508
      %v510 = vpop.f32.mrb[0].mxu0
      %v511 = vadd.f32 0.0, %v510
      %512 = vmatprep.mubr.bf16.mxu0 0
      %513 = vmatmul.mubr.bf16.gmra.mrb[0].mxu0 %v422
      %v514 = vpop.f32.mrb[0].mxu0
      %v515 = vadd.f32 0.0, %v514
      %v516 = vpop.f32.mrb[0].mxu0
      %v517 = vadd.f32 0.0, %v516
      %v518 = vpop.f32.mrb[0].mxu0
      %v519 = vadd.f32 0.0, %v518
      %v520 = vpop.f32.mrb[0].mxu0
      %v521 = vadd.f32 0.0, %v520
      %522 = vmatprep.mubr.bf16.mxu0 0
      %523 = vmatmul.mubr.bf16.gmra.mrb[0].mxu0 %v425
      %v524 = vpop.f32.mrb[0].mxu0
      %v525 = vadd.f32 0.0, %v524
      %v526 = vpop.f32.mrb[0].mxu0
      %v527 = vadd.f32 0.0, %v526
      %v528 = vpop.f32.mrb[0].mxu0
      %v529 = vadd.f32 0.0, %v528
      %v530 = vpop.f32.mrb[0].mxu0
      %v531 = vadd.f32 0.0, %v530
      %532 = vmatprep.mubr.bf16.mxu0 0
      %533 = vmatmul.mubr.bf16.gmra.mrb[0].mxu0 %v428
      %v534 = vpop.f32.mrb[0].mxu0
      %v535 = vadd.f32 0.0, %v534
      %v536 = vpop.f32.mrb[0].mxu0
      %v537 = vadd.f32 0.0, %v536
      %v538 = vpop.f32.mrb[0].mxu0
      %v539 = vadd.f32 0.0, %v538
      %v540 = vpop.f32.mrb[0].mxu0
      %v541 = vadd.f32 0.0, %v540
      %542 = vdwg.mxu0
      %v543 = vadd.f32 %v269, %v465
      %v544 = vadd.f32 %v270, %v467
      %v545 = vadd.f32 %v271, %v469
      %v546 = vadd.f32 %v272, %v471
      %v547 = vadd.f32 %v273, %v475
      %v548 = vadd.f32 %v274, %v477
      %v549 = vadd.f32 %v275, %v479
      %v550 = vadd.f32 %v276, %v481
      %v551 = vadd.f32 %v277, %v485
      %v552 = vadd.f32 %v278, %v487
      %v553 = vadd.f32 %v279, %v489
      %v554 = vadd.f32 %v280, %v491
      %v555 = vadd.f32 %v281, %v495
      %v556 = vadd.f32 %v282, %v497
      %v557 = vadd.f32 %v283, %v499
      %v558 = vadd.f32 %v284, %v501
      %v559 = vadd.f32 %v285, %v505
      %v560 = vadd.f32 %v286, %v507
      %v561 = vadd.f32 %v287, %v509
      %v562 = vadd.f32 %v288, %v511
      %v563 = vadd.f32 %v289, %v515
      %v564 = vadd.f32 %v290, %v517
      %v565 = vadd.f32 %v291, %v519
      %v566 = vadd.f32 %v292, %v521
      %v567 = vadd.f32 %v293, %v525
      %v568 = vadd.f32 %v294, %v527
      %v569 = vadd.f32 %v295, %v529
      %v570 = vadd.f32 %v296, %v531
      %v571 = vadd.f32 %v297, %v535
      %v572 = vadd.f32 %v298, %v537
      %v573 = vadd.f32 %v299, %v539
      %v574 = vadd.f32 %v300, %v541
      %575 = vst [vmem:[#allocation2] sm:$0xff] %v543
      %vm576 = vcmask 64512
      %577 = vst.msk [vmem:[#allocation2 + $0x8] sm:$0xff] %vm576, %v544
      %578 = vst [vmem:[#allocation2 + $0x10] sm:$0xff] %v545
      %579 = vst.msk [vmem:[#allocation2 + $0x18] sm:$0xff] %vm576, %v546
      %580 = vst [vmem:[#allocation2 + $0x20] sm:$0xff] %v547
      %581 = vst.msk [vmem:[#allocation2 + $0x28] sm:$0xff] %vm576, %v548
      %582 = vst [vmem:[#allocation2 + $0x30] sm:$0xff] %v549
      %583 = vst.msk [vmem:[#allocation2 + $0x38] sm:$0xff] %vm576, %v550
      %584 = vst [vmem:[#allocation2 + $0x40] sm:$0xff] %v551
      %585 = vst.msk [vmem:[#allocation2 + $0x48] sm:$0xff] %vm576, %v552
      %586 = vst [vmem:[#allocation2 + $0x50] sm:$0xff] %v553
      %587 = vst.msk [vmem:[#allocation2 + $0x58] sm:$0xff] %vm576, %v554
      %588 = vst [vmem:[#allocation2 + $0x60] sm:$0xff] %v555
      %589 = vst.msk [vmem:[#allocation2 + $0x68] sm:$0xff] %vm576, %v556
      %590 = vst [vmem:[#allocation2 + $0x70] sm:$0xff] %v557
      %591 = vst.msk [vmem:[#allocation2 + $0x78] sm:$0xff] %vm576, %v558
      %592 = vst [vmem:[#allocation2 + $0x80] sm:$0xff] %v559
      %593 = vst.msk [vmem:[#allocation2 + $0x88] sm:$0xff] %vm576, %v560
      %594 = vst [vmem:[#allocation2 + $0x90] sm:$0xff] %v561
      %595 = vst.msk [vmem:[#allocation2 + $0x98] sm:$0xff] %vm576, %v562
      %596 = vst [vmem:[#allocation2 + $0xa0] sm:$0xff] %v563
      %597 = vst.msk [vmem:[#allocation2 + $0xa8] sm:$0xff] %vm576, %v564
      %598 = vst [vmem:[#allocation2 + $0xb0] sm:$0xff] %v565
      %599 = vst.msk [vmem:[#allocation2 + $0xb8] sm:$0xff] %vm576, %v566
      %600 = vst [vmem:[#allocation2 + $0xc0] sm:$0xff] %v567
      %601 = vst.msk [vmem:[#allocation2 + $0xc8] sm:$0xff] %vm576, %v568
      %602 = vst [vmem:[#allocation2 + $0xd0] sm:$0xff] %v569
      %603 = vst.msk [vmem:[#allocation2 + $0xd8] sm:$0xff] %vm576, %v570
      %604 = vst [vmem:[#allocation2 + $0xe0] sm:$0xff] %v571
      %605 = vst.msk [vmem:[#allocation2 + $0xe8] sm:$0xff] %vm576, %v572
      %606 = vst [vmem:[#allocation2 + $0xf0] sm:$0xff] %v573
      %607 = vst.msk [vmem:[#allocation2 + $0xf8] sm:$0xff] %vm576, %v574
      // Predicated region
      $region33: #{tpu_custom_call.1} parent=27 // pred_check
        %p608 = pneg %p232
      $region34: #{tpu_custom_call.1} parent=27 // pred_check_branch
        %610 = sbr.rel (%p608) target = $region36
      $region35: #{tpu_custom_call.1} parent=27 // pred_region
        %v611 = vld [vmem:[#allocation2] sm:$0xff]
        %v612 = vld [vmem:[#allocation2 + $0x8] sm:$0xff]
        %v613 = vld [vmem:[#allocation2 + $0x10] sm:$0xff]
        %v614 = vld [vmem:[#allocation2 + $0x18] sm:$0xff]
        %v615 = vld [vmem:[#allocation2 + $0x20] sm:$0xff]
        %v616 = vld [vmem:[#allocation2 + $0x28] sm:$0xff]
        %v617 = vld [vmem:[#allocation2 + $0x30] sm:$0xff]
        %v618 = vld [vmem:[#allocation2 + $0x38] sm:$0xff]
        %v619 = vld [vmem:[#allocation2 + $0x40] sm:$0xff]
        %v620 = vld [vmem:[#allocation2 + $0x48] sm:$0xff]
        %v621 = vld [vmem:[#allocation2 + $0x50] sm:$0xff]
        %v622 = vld [vmem:[#allocation2 + $0x58] sm:$0xff]
        %v623 = vld [vmem:[#allocation2 + $0x60] sm:$0xff]
        %v624 = vld [vmem:[#allocation2 + $0x68] sm:$0xff]
        %v625 = vld [vmem:[#allocation2 + $0x70] sm:$0xff]
        %v626 = vld [vmem:[#allocation2 + $0x78] sm:$0xff]
        %v627 = vld [vmem:[#allocation2 + $0x80] sm:$0xff]
        %v628 = vld [vmem:[#allocation2 + $0x88] sm:$0xff]
        %v629 = vld [vmem:[#allocation2 + $0x90] sm:$0xff]
        %v630 = vld [vmem:[#allocation2 + $0x98] sm:$0xff]
        %v631 = vld [vmem:[#allocation2 + $0xa0] sm:$0xff]
        %v632 = vld [vmem:[#allocation2 + $0xa8] sm:$0xff]
        %v633 = vld [vmem:[#allocation2 + $0xb0] sm:$0xff]
        %v634 = vld [vmem:[#allocation2 + $0xb8] sm:$0xff]
        %v635 = vld [vmem:[#allocation2 + $0xc0] sm:$0xff]
        %v636 = vld [vmem:[#allocation2 + $0xc8] sm:$0xff]
        %v637 = vld [vmem:[#allocation2 + $0xd0] sm:$0xff]
        %v638 = vld [vmem:[#allocation2 + $0xd8] sm:$0xff]
        %v639 = vld [vmem:[#allocation2 + $0xe0] sm:$0xff]
        %v640 = vld [vmem:[#allocation2 + $0xe8] sm:$0xff]
        %v641 = vld [vmem:[#allocation2 + $0xf0] sm:$0xff]
        %v642 = vld [vmem:[#allocation2 + $0xf8] sm:$0xff]
        %643 = vst [vmem:[%s228] sm:$0xff] %v611
        %644 = vst.msk [vmem:[%s228 + $0x8] sm:$0xff] %vm576, %v612
        %645 = vst [vmem:[%s228 + $0x10] sm:$0xff] %v613
        %646 = vst.msk [vmem:[%s228 + $0x18] sm:$0xff] %vm576, %v614
        %647 = vst [vmem:[%s228 + $0x20] sm:$0xff] %v615
        %648 = vst.msk [vmem:[%s228 + $0x28] sm:$0xff] %vm576, %v616
        %649 = vst [vmem:[%s228 + $0x30] sm:$0xff] %v617
        %650 = vst.msk [vmem:[%s228 + $0x38] sm:$0xff] %vm576, %v618
        %651 = vst [vmem:[%s228 + $0x40] sm:$0xff] %v619
        %652 = vst.msk [vmem:[%s228 + $0x48] sm:$0xff] %vm576, %v620
        %653 = vst [vmem:[%s228 + $0x50] sm:$0xff] %v621
        %654 = vst.msk [vmem:[%s228 + $0x58] sm:$0xff] %vm576, %v622
        %655 = vst [vmem:[%s228 + $0x60] sm:$0xff] %v623
        %656 = vst.msk [vmem:[%s228 + $0x68] sm:$0xff] %vm576, %v624
        %657 = vst [vmem:[%s228 + $0x70] sm:$0xff] %v625
        %658 = vst.msk [vmem:[%s228 + $0x78] sm:$0xff] %vm576, %v626
        %659 = vst [vmem:[%s228 + $0x80] sm:$0xff] %v627
        %660 = vst.msk [vmem:[%s228 + $0x88] sm:$0xff] %vm576, %v628
        %661 = vst [vmem:[%s228 + $0x90] sm:$0xff] %v629
        %662 = vst.msk [vmem:[%s228 + $0x98] sm:$0xff] %vm576, %v630
        %663 = vst [vmem:[%s228 + $0xa0] sm:$0xff] %v631
        %664 = vst.msk [vmem:[%s228 + $0xa8] sm:$0xff] %vm576, %v632
        %665 = vst [vmem:[%s228 + $0xb0] sm:$0xff] %v633
        %666 = vst.msk [vmem:[%s228 + $0xb8] sm:$0xff] %vm576, %v634
        %667 = vst [vmem:[%s228 + $0xc0] sm:$0xff] %v635
        %668 = vst.msk [vmem:[%s228 + $0xc8] sm:$0xff] %vm576, %v636
        %669 = vst [vmem:[%s228 + $0xd0] sm:$0xff] %v637
        %670 = vst.msk [vmem:[%s228 + $0xd8] sm:$0xff] %vm576, %v638
        %671 = vst [vmem:[%s228 + $0xe0] sm:$0xff] %v639
        %672 = vst.msk [vmem:[%s228 + $0xe8] sm:$0xff] %vm576, %v640
        %673 = vst [vmem:[%s228 + $0xf0] sm:$0xff] %v641
        %674 = vst.msk [vmem:[%s228 + $0xf8] sm:$0xff] %vm576, %v642
      $region36: #{tpu_custom_call.1} parent=27 // pred_fallthru
        _
      %s675 = smul.u32 16, %s18
      %s676 = smul.u32 2, %s19
      %p677 = scmp.lt.s32.totalorder %s675, 31
      %s678 = scalar_select %p677, %s675, 31
      %p679 = scmp.lt.s32.totalorder %s676, 1
      %s680 = scalar_select %p679, %s676, 1
      %s681 = smul.addr %s678, 2
      %s682 = sadd.s32 %s680, %s681
      %s683 = smul.addr %s682, 8
      %s684 = scalar_lea.vmem %s2, %s683
      // Predicated region
      $region37: #{tpu_custom_call.1} parent=27 // pred_check
        %p685 = pneg %p108
      $region38: #{tpu_custom_call.1} parent=27 // pred_check_branch
        %687 = sbr.rel (%p685) target = $region40
      $region39: #{tpu_custom_call.1} parent=27 // pred_region
        %s688 = smul.u32 16, %s18
        %s689 = smul.u32 2, %s19
      $region40: #{tpu_custom_call.1} parent=27 // pred_fallthru
        _
    $region28: #{tpu_custom_call.1} parent=5 // pred_fallthru
      _
    %p690 = scmp.le.s32.totalorder 2, %s8
    // Predicated region
    $region41: #{tpu_custom_call.1} parent=5 // pred_check
      %p691 = pneg %p690
    $region42: #{tpu_custom_call.1} parent=5 // pred_check_branch
      %693 = sbr.rel (%p691) target = $region44
    $region43: #{tpu_custom_call.1} parent=5 // pred_region
      %s694 = ssub.s32 %s8, 2
      // Predicated region
      $region45: #{tpu_custom_call.1} parent=43 // pred_check
        %p695 = pneg %p114
      $region46: #{tpu_custom_call.1} parent=43 // pred_check_branch
        %697 = sbr.rel (%p695) target = $region48
      $region47: #{tpu_custom_call.1} parent=43 // pred_region
        %s698 = smul.u32 16, %s21
        %s699 = smul.u32 2, %s22
        %p700 = scmp.lt.s32.totalorder %s698, 31
        %s701 = scalar_select %p700, %s698, 31
        %p702 = scmp.lt.s32.totalorder %s699, 1
        %s703 = scalar_select %p702, %s699, 1
        %s704 = smul.addr %s701, 2
        %s705 = sadd.s32 %s703, %s704
        %s706 = smul.addr %s705, 8
        %s707 = scalar_lea.vmem %s2, %s706
      $region48: #{tpu_custom_call.1} parent=43 // pred_fallthru
        _
    $region44: #{tpu_custom_call.1} parent=5 // pred_fallthru
      _
  $region6: #{tpu_custom_call.1} parent=0 // loop_footer
    %s12 = sadd.s32 1, %s8
  $region7: #{tpu_custom_call.1} parent=0 // loop_footer_branch
    %7 = sbr.rel target = $region3
  $region8: #{tpu_custom_call.1} parent=0 // loop_exit
    _

</llo_original>
